<compile_context>
chip_gen: v5e
topology: v5e:2x2
jax: 0.10.0
libtpu: 0.0.40
codegen_flags: <defaults>
</compile_context>

<pallas_src>
import jax
import jax.numpy as jnp
from jax.experimental import pallas as pl
from jax.experimental.pallas import tpu as pltpu


def _swish_kernel(x_ref, o_ref):
    # Compute in f32 for accuracy; exp runs on the EUP (free slot) and the
    # kernel is HBM-bandwidth-bound anyway.
    xf = x_ref[...].astype(jnp.float32)
    sig = 1.0 / (1.0 + jnp.exp(-xf))
    o_ref[...] = (xf * sig).astype(o_ref.dtype)


def _round_down8(v):
    return max(8, (v // 8) * 8)


def _swish_impl(x, *, target_block_bytes=4 << 20):
    """Elementwise swish (x * sigmoid(x)). Any shape/dtype; hot path in Pallas."""
    orig_shape = x.shape
    orig_dtype = x.dtype
    n = int(x.size)
    if n == 0:
        return x
    itemsize = jnp.dtype(orig_dtype).itemsize

    # ---- lane-dense width that avoids a padding copy whenever possible ----
    lanes = None
    for cand in (1024, 512, 256, 128):
        if n % cand == 0:
            lanes = cand
            break

    x_flat = jnp.ravel(x)                 # layout-preserving for contiguous x
    if lanes is None:                     # fallback: pad up to a 128-lane row
        lanes = 128
        n_pad = pl.cdiv(n, lanes) * lanes
        x_flat = jnp.pad(x_flat, (0, n_pad - n))
    else:
        n_pad = n
    rows = n_pad // lanes
    x2d = x_flat.reshape(rows, lanes)

    # ---- block sizing: multi-MiB blocks, but keep >=2 grid steps if we can ----
    if rows <= 8:
        block_rows = rows                 # block == full array (always legal)
    else:
        target_rows = _round_down8(max(8, target_block_bytes // (lanes * itemsize)))
        half_rows = _round_down8((rows + 1) // 2)   # >=2 steps for megacore
        block_rows = min(target_rows, _round_down8(rows), half_rows)

    grid = (pl.cdiv(rows, block_rows),)   # partial tail block: reads padded,
                                          # writes masked (elementwise-safe)

    block_bytes = block_rows * lanes * itemsize
    # in + out, double-buffered, plus slack; 32 MiB floor covers v5e's 16 MiB
    # default scoped limit, 64 MiB cap stays legal on v7x's 64 MiB VMEM.
    vmem_bytes = int(min(max(4 * block_bytes + (4 << 20), 32 << 20), 64 << 20))

    out2d = pl.pallas_call(
        _swish_kernel,
        out_shape=jax.ShapeDtypeStruct((rows, lanes), orig_dtype),
        grid_spec=pltpu.PrefetchScalarGridSpec(
            num_scalar_prefetch=0,
            grid=grid,
            in_specs=[pl.BlockSpec((block_rows, lanes), lambda i: (i, 0))],
            out_specs=pl.BlockSpec((block_rows, lanes), lambda i: (i, 0)),
        ),
        compiler_params=pltpu.CompilerParams(
            dimension_semantics=("parallel",),
            vmem_limit_bytes=vmem_bytes,
        ),
    )(x2d)

    out_flat = out2d.reshape(-1)
    if n_pad != n:
        out_flat = out_flat[:n]
    return out_flat.reshape(orig_shape)


# JIT the whole wrapper so the ravel/reshape/pad/slice plumbing fuses with the
# Pallas call (shapes/dtypes are static under jit, so the Python block-sizing
# logic stays trace-time).
swish = jax.jit(_swish_impl)


if __name__ == "__main__":
    key = jax.random.PRNGKey(0)
    # Swish in af_module.py is applied to NCHW conv activations.
    x = jax.random.normal(key, (2, 4, 16, 16), dtype=jnp.float32)
    out = jax.block_until_ready(swish(x))
    ref = x * jax.nn.sigmoid(x)
    assert out.shape == x.shape and out.dtype == x.dtype
    assert jnp.allclose(out, ref, atol=1e-6, rtol=1e-6)

    # Extra coverage: large multi-block path, padded/masked-tail path, bf16.
    for shape, dtype, tol in [((8, 64, 64, 64), jnp.float32, 1e-6),
                              ((3, 5, 17, 19), jnp.float32, 1e-6),
                              ((4, 8, 32, 32), jnp.bfloat16, 2e-2)]:
        key, sub = jax.random.split(key)
        xi = jax.random.normal(sub, shape, dtype=dtype)
        oi = jax.block_until_ready(swish(xi))
        xf = xi.astype(jnp.float32)
        refi = (xf * jax.nn.sigmoid(xf)).astype(dtype)
        assert oi.shape == xi.shape and oi.dtype == xi.dtype
        assert jnp.allclose(oi.astype(jnp.float32), refi.astype(jnp.float32),
                            atol=tol, rtol=tol)

    print("KERNEL_OK")
</pallas_src>

<mosaic_0001>
module attributes {stable_mosaic.version = 11 : i64} {
  func.func @_swish_kernel(%arg0: i32, %arg1: memref<2x1024xf32, #tpu.memory_space<vmem>>, %arg2: memref<2x1024xf32, #tpu.memory_space<vmem>>) attributes {dimension_semantics = [#tpu.dimension_semantics<parallel>], iteration_bounds = array<i64: 1>, scalar_prefetch = 0 : i64, scratch_operands = 0 : i64, tpu.core_type = #tpu.core_type<tc>, window_params = [{transform_indices = @transform_0, window_bounds = array<i64: 2, 1024>}, {transform_indices = @transform_1, window_bounds = array<i64: 2, 1024>}]} {
    %c0 = arith.constant 0 : index
    %c0_0 = arith.constant 0 : index
    %0 = vector.load %arg1[%c0, %c0_0] : memref<2x1024xf32, #tpu.memory_space<vmem>>, vector<2x1024xf32>
    %cst = arith.constant 0.000000e+00 : f32
    %1 = vector.broadcast %cst : f32 to vector<2x1024xf32>
    %2 = arith.subf %1, %0 : vector<2x1024xf32>
    %3 = math.exp %2 : vector<2x1024xf32>
    %cst_1 = arith.constant 1.000000e+00 : f32
    %4 = vector.broadcast %cst_1 : f32 to vector<2x1024xf32>
    %5 = arith.addf %4, %3 : vector<2x1024xf32>
    %cst_2 = arith.constant 1.000000e+00 : f32
    %6 = vector.broadcast %cst_2 : f32 to vector<2x1024xf32>
    %7 = arith.divf %6, %5 : vector<2x1024xf32>
    %8 = arith.mulf %0, %7 : vector<2x1024xf32>
    %c0_3 = arith.constant 0 : index
    %c0_4 = arith.constant 0 : index
    %9 = vector.load %arg2[%c0_3, %c0_4] : memref<2x1024xf32, #tpu.memory_space<vmem>>, vector<2x1024xf32>
    tpu.vector_store %arg2[%c0_3, %c0_4], %8 {strides = array<i32>} : memref<2x1024xf32, #tpu.memory_space<vmem>>, vector<2x1024xf32>,
    return
  }
  func.func @transform_0(%arg0: i32) -> (i32, i32) {
    %c0_i32 = arith.constant 0 : i32
    %c0_i32_0 = arith.constant 0 : i32
    return %arg0, %c0_i32 : i32, i32
  }
  func.func @transform_1(%arg0: i32) -> (i32, i32) {
    %c0_i32 = arith.constant 0 : i32
    %c0_i32_0 = arith.constant 0 : i32
    return %arg0, %c0_i32 : i32, i32
  }
}

</mosaic_0001>

<llo_original>
// kernel: _swish_impl.1
$region0: #{_swish_impl.1}
  #allocation0 [shape = 'u32[]', space=smem, size = 0x4, offset = 0x4, fixed_abs, tag = 'smem constant byte address 0x4 - core index']
  #allocation1 [shape = 'u32[72,128]{1,0:T(1,128)}', space=vmem, size = 0x9000, scoped, tag = 'internal scratch']
  %s0 = inlined_call_operand.vmem [shape: f32[2,1024], index: 0, kind: input, shape index: {}]
  %s1 = inlined_call_operand.vmem [shape: f32[2,1024], index: 1, kind: output, shape index: {}]
  %s2 = sld [smem:[#allocation0]]
  $region14: #{_swish_impl.1} parent=0
    _
  %s4 = ssub.s32 1, %s2
  %s5 = scalar_select 0, %s4, %s2
  // Predicated region
  $region2: #{_swish_impl.1} parent=0 // pred_check
    _
  $region3: #{_swish_impl.1} parent=0 // pred_check_branch
    %7 = sbr.rel (0) target = $region5
  $region4: #{_swish_impl.1} parent=0 // pred_region
    _
  $region5: #{_swish_impl.1} parent=0 // pred_fallthru
    _
  %v8 = vld [vmem:[%s0] sm:$0xff]
  %v9 = vld [vmem:[%s0 + $0x8] sm:$0xff]
  %v10 = vsub.f32 0.0, %v8
  %v11 = vsub.f32 0.0, %v9
  %v12 = vmul.f32 %v10, 1.442695
  %v13 = vpow.pop %v12
  %v14 = vmul.f32 %v11, 1.442695
  %v15 = vpow.pop %v14
  %v16 = vadd.f32 %v13, 1.0
  %v17 = vadd.f32 %v15, 1.0
  %v18 = vrcp.pop %v16
  %v19 = vmul.f32 %v16, %v18
  %v20 = vsub.f32 1.0, %v19
  %v21 = vmul.f32 %v18, %v20
  %v22 = vadd.f32 %v18, %v21
  %vm23 = vweird.f32 %v16
  %vm24 = vweird.f32 %v18
  %vm25 = vmor %vm23, %vm24
  %v26 = vsel %vm25, %v18, %v22
  %v27 = vand.u32 2147483647, %v16
  %vm28 = vcmp.eq.f32.partialorder %v27, 8.507059e+37
  %v29 = vand.u32 %v16, 2147483648
  %v30 = vor.u32 1.1754944e-38, %v29
  %v31 = vsel %vm28, %v30, %v26
  %v32 = vmul.f32 1.0, %v31
  %v33 = vrcp.pop %v17
  %v34 = vmul.f32 %v17, %v33
  %v35 = vsub.f32 1.0, %v34
  %v36 = vmul.f32 %v33, %v35
  %v37 = vadd.f32 %v33, %v36
  %vm38 = vweird.f32 %v17
  %vm39 = vweird.f32 %v33
  %vm40 = vmor %vm38, %vm39
  %v41 = vsel %vm40, %v33, %v37
  %v42 = vand.u32 2147483647, %v17
  %vm43 = vcmp.eq.f32.partialorder %v42, 8.507059e+37
  %v44 = vand.u32 %v17, 2147483648
  %v45 = vor.u32 1.1754944e-38, %v44
  %v46 = vsel %vm43, %v45, %v41
  %v47 = vmul.f32 1.0, %v46
  %v48 = vmul.f32 %v8, %v32
  %v49 = vmul.f32 %v9, %v47
  %50 = vst [vmem:[%s1] sm:$0xff] %v48
  %51 = vst [vmem:[%s1 + $0x8] sm:$0xff] %v49
  // Predicated region
  $region6: #{_swish_impl.1} parent=0 // pred_check
    _
  $region7: #{_swish_impl.1} parent=0 // pred_check_branch
    %53 = sbr.rel (0) target = $region9
  $region8: #{_swish_impl.1} parent=0 // pred_region
    _
  $region9: #{_swish_impl.1} parent=0 // pred_fallthru
    _
  // Predicated region
  $region10: #{_swish_impl.1} parent=0 // pred_check
    _
  $region11: #{_swish_impl.1} parent=0 // pred_check_branch
    %55 = sbr.rel (0) target = $region13
  $region12: #{_swish_impl.1} parent=0 // pred_region
    _
  $region13: #{_swish_impl.1} parent=0 // pred_fallthru
    _

</llo_original>
